<compile_context>
chip_gen: v5e
topology: v5e:2x2
jax: 0.10.0
libtpu: 0.0.40
codegen_flags: <defaults>
</compile_context>

<pallas_src>
import jax
import jax.numpy as jnp
from jax.experimental import pallas as pl
from jax.experimental.pallas import tpu as pltpu

_LANE = 128


def _make_mlp_kernel(num_layers):
    """Fused MLP kernel: refs = (x, w1, b1, ..., wL, bL, out)."""

    def kernel(*refs):
        x_ref = refs[0]
        o_ref = refs[-1]
        wb = refs[1:-1]

        h = x_ref[...]
        for li in range(num_layers):
            w = wb[2 * li][...]
            b = wb[2 * li + 1][...]
            # MXU matmul with f32 accumulation; bias add (+ ReLU) in f32 on the VPU.
            acc = jnp.dot(h, w, preferred_element_type=jnp.float32) + b
            if li < num_layers - 1:
                acc = jnp.maximum(acc, 0.0)        # ReLU (dropout == identity in eval)
                h = acc.astype(w.dtype)            # feed next MXU pass in compute dtype
            else:
                h = acc
        o_ref[...] = h.astype(o_ref.dtype)

    return kernel


def _auto_tile_b(B):
    """Pick a large batch tile, keeping >=2 grid steps when possible (v7x megacore)."""
    b8 = ((B + 7) // 8) * 8                 # round up to sublane multiple
    tile_b = min(b8, 1024)
    if b8 // tile_b < 2 and tile_b >= 16 and (tile_b // 2) % 8 == 0:
        tile_b //= 2
    return tile_b


def simple_nn_forward(x, params, *, tile_b=None, use_bf16=True):
    """Fused SimpleNN forward pass (eval mode: dropout = identity).

    x:      (B, input_dim) float32
    params: {"ws": [Wi as (in, out)], "bs": [bi as (1, out)]}
    """
    ws = list(params["ws"])
    bs = list(params["bs"])
    num_layers = len(ws)
    assert num_layers == len(bs) and num_layers >= 1

    B, d_in = x.shape
    d_out = ws[-1].shape[1]

    # --- pad the output feature dim to a full 128-lane width (lane-dense stores) ---
    d_out_p = max(_LANE, ((d_out + _LANE - 1) // _LANE) * _LANE)
    if d_out_p != d_out:
        ws[-1] = jnp.pad(ws[-1], ((0, 0), (0, d_out_p - d_out)))
        bs[-1] = jnp.pad(bs[-1], ((0, 0), (0, d_out_p - d_out)))

    # --- cast MXU operands to bf16 (f32 accumulation stays in the kernel) ---
    cdtype = jnp.bfloat16 if use_bf16 else jnp.float32
    ws = [w.astype(cdtype) for w in ws]
    bs = [b.astype(jnp.float32) for b in bs]     # biases added post-accumulation in f32

    # --- batch tiling ---
    if tile_b is None:
        tile_b = _auto_tile_b(B)
    B_pad = pl.cdiv(B, tile_b) * tile_b
    xc = x.astype(cdtype)
    if B_pad != B:
        xc = jnp.pad(xc, ((0, B_pad - B), (0, 0)))
    grid = (B_pad // tile_b,)

    # --- specs ---
    whole = lambda i: (0, 0)                      # weights/biases: same full block each step
    in_specs = [pl.BlockSpec((tile_b, d_in), lambda i: (i, 0))]
    flat_wb = []
    for w, b in zip(ws, bs):
        in_specs.append(pl.BlockSpec(w.shape, whole))
        in_specs.append(pl.BlockSpec(b.shape, whole))
        flat_wb.extend((w, b))
    out_spec = pl.BlockSpec((tile_b, d_out_p), lambda i: (i, 0))

    # --- advisory cost estimate for XLA scheduling ---
    flops = 2 * B_pad * sum(int(w.shape[0]) * int(w.shape[1]) for w in ws)
    bytes_accessed = (
        xc.size * xc.dtype.itemsize
        + sum(a.size * a.dtype.itemsize for a in flat_wb)
        + B_pad * d_out_p * 4
    )
    cost = pl.CostEstimate(flops=flops, transcendentals=0,
                           bytes_accessed=bytes_accessed)

    out = pl.pallas_call(
        _make_mlp_kernel(num_layers),
        out_shape=jax.ShapeDtypeStruct((B_pad, d_out_p), jnp.float32),
        grid=grid,
        in_specs=in_specs,
        out_specs=out_spec,
        compiler_params=pltpu.CompilerParams(
            dimension_semantics=("parallel",),
        ),
        cost_estimate=cost,
    )(xc, *flat_wb)

    return out[:B, :d_out]


def init_params(key, input_dim, output_dim, hidden_layers):
    """Deterministic init mirroring nn.Linear default U(-1/sqrt(fan_in), 1/sqrt(fan_in)).

    Weights are stored pre-transposed as (in, out); biases as (1, out).
    """
    dims = []
    prev = input_dim
    for h in hidden_layers:
        dims.append((prev, h))
        prev = h
    dims.append((prev, output_dim))

    ws, bs = [], []
    for fan_in, fan_out in dims:
        key, kw, kb = jax.random.split(key, 3)
        bound = 1.0 / jnp.sqrt(jnp.float32(fan_in))
        ws.append(jax.random.uniform(kw, (fan_in, fan_out), jnp.float32, -bound, bound))
        bs.append(jax.random.uniform(kb, (1, fan_out), jnp.float32, -bound, bound))
    return {"ws": ws, "bs": bs}


def reference_forward(x, params):
    """Plain-JAX f32 reference of the same forward pass (eval mode: dropout = identity)."""
    h = x
    ws, bs = params["ws"], params["bs"]
    for w, b in zip(ws[:-1], bs[:-1]):
        h = jnp.maximum(h @ w + b, 0.0)
    return h @ ws[-1] + bs[-1]


if __name__ == "__main__":
    # SimpleNN(input_dim=32, output_dim=8) with default hidden_layers=[64, 32].
    B, INPUT_DIM, OUTPUT_DIM = 256, 32, 8
    HIDDEN_LAYERS = [64, 32]

    key = jax.random.PRNGKey(0)
    key, kx = jax.random.split(key)
    x = jax.random.normal(kx, (B, INPUT_DIM), jnp.float32)
    params = init_params(key, INPUT_DIM, OUTPUT_DIM, HIDDEN_LAYERS)

    ref = reference_forward(x, params)

    # f32-operand path: bitwise-class check against the reference.
    out_f32 = jax.block_until_ready(simple_nn_forward(x, params, use_bf16=False))
    assert out_f32.shape == (B, OUTPUT_DIM)
    assert jnp.allclose(out_f32, ref, atol=1e-5, rtol=1e-5), "f32 Pallas kernel mismatch"

    # bf16-operand path (default, MXU-optimized): loose tolerance vs the f32 reference.
    out = jax.block_until_ready(simple_nn_forward(x, params))  # auto tile -> (2,) grid steps
    assert out.shape == (B, OUTPUT_DIM)
    assert jnp.allclose(out, ref, atol=5e-2, rtol=5e-2), "bf16 Pallas kernel mismatch"

    print("KERNEL_OK")
</pallas_src>

<mosaic_0001>
module attributes {stable_mosaic.version = 11 : i64} {
  func.func @kernel(%arg0: i32, %arg1: memref<128x32xf32, #tpu.memory_space<vmem>>, %arg2: memref<32x64xf32, #tpu.memory_space<vmem>>, %arg3: memref<1x64xf32, #tpu.memory_space<vmem>>, %arg4: memref<64x32xf32, #tpu.memory_space<vmem>>, %arg5: memref<1x32xf32, #tpu.memory_space<vmem>>, %arg6: memref<32x128xf32, #tpu.memory_space<vmem>>, %arg7: memref<1x128xf32, #tpu.memory_space<vmem>>, %arg8: memref<128x128xf32, #tpu.memory_space<vmem>>) attributes {dimension_semantics = [#tpu.dimension_semantics<parallel>], iteration_bounds = array<i64: 2>, scalar_prefetch = 0 : i64, scratch_operands = 0 : i64, tpu.core_type = #tpu.core_type<tc>, window_params = [{transform_indices = @transform_0, window_bounds = array<i64: 128, 32>}, {pipeline_mode = #tpu.pipeline_mode<synchronous>, transform_indices = @transform_1, window_bounds = array<i64: 32, 64>}, {pipeline_mode = #tpu.pipeline_mode<synchronous>, transform_indices = @transform_2, window_bounds = array<i64: 1, 64>}, {pipeline_mode = #tpu.pipeline_mode<synchronous>, transform_indices = @transform_3, window_bounds = array<i64: 64, 32>}, {pipeline_mode = #tpu.pipeline_mode<synchronous>, transform_indices = @transform_4, window_bounds = array<i64: 1, 32>}, {pipeline_mode = #tpu.pipeline_mode<synchronous>, transform_indices = @transform_5, window_bounds = array<i64: 32, 128>}, {pipeline_mode = #tpu.pipeline_mode<synchronous>, transform_indices = @transform_6, window_bounds = array<i64: 1, 128>}, {transform_indices = @transform_7, window_bounds = array<i64: 128, 128>}]} {
    %c0 = arith.constant 0 : index
    %c0_0 = arith.constant 0 : index
    %0 = vector.load %arg1[%c0, %c0_0] : memref<128x32xf32, #tpu.memory_space<vmem>>, vector<128x32xf32>
    %c0_1 = arith.constant 0 : index
    %c0_2 = arith.constant 0 : index
    %1 = vector.load %arg2[%c0_1, %c0_2] : memref<32x64xf32, #tpu.memory_space<vmem>>, vector<32x64xf32>
    %c0_3 = arith.constant 0 : index
    %c0_4 = arith.constant 0 : index
    %2 = vector.load %arg3[%c0_3, %c0_4] : memref<1x64xf32, #tpu.memory_space<vmem>>, vector<1x64xf32>
    %cst = arith.constant dense<0.000000e+00> : vector<128x64xf32>
    %3 = tpu.matmul %0, %1, %cst {dimension_numbers = #tpu.dot_dimension_numbers<[1], [0], [0], [1], [0, 0, 1, 1], [], []>} : vector<128x32xf32>, vector<32x64xf32>, vector<128x64xf32> -> vector<128x64xf32>
    %4 = vector.broadcast %2 : vector<1x64xf32> to vector<128x64xf32>
    %5 = arith.addf %3, %4 : vector<128x64xf32>
    %cst_5 = arith.constant 0.000000e+00 : f32
    %6 = vector.broadcast %cst_5 : f32 to vector<128x64xf32>
    %7 = arith.maximumf %5, %6 : vector<128x64xf32>
    %c0_6 = arith.constant 0 : index
    %c0_7 = arith.constant 0 : index
    %8 = vector.load %arg4[%c0_6, %c0_7] : memref<64x32xf32, #tpu.memory_space<vmem>>, vector<64x32xf32>
    %c0_8 = arith.constant 0 : index
    %c0_9 = arith.constant 0 : index
    %9 = vector.load %arg5[%c0_8, %c0_9] : memref<1x32xf32, #tpu.memory_space<vmem>>, vector<1x32xf32>
    %cst_10 = arith.constant dense<0.000000e+00> : vector<128x32xf32>
    %10 = tpu.matmul %7, %8, %cst_10 {dimension_numbers = #tpu.dot_dimension_numbers<[1], [0], [0], [1], [0, 0, 1, 1], [], []>} : vector<128x64xf32>, vector<64x32xf32>, vector<128x32xf32> -> vector<128x32xf32>
    %11 = vector.broadcast %9 : vector<1x32xf32> to vector<128x32xf32>
    %12 = arith.addf %10, %11 : vector<128x32xf32>
    %cst_11 = arith.constant 0.000000e+00 : f32
    %13 = vector.broadcast %cst_11 : f32 to vector<128x32xf32>
    %14 = arith.maximumf %12, %13 : vector<128x32xf32>
    %c0_12 = arith.constant 0 : index
    %c0_13 = arith.constant 0 : index
    %15 = vector.load %arg6[%c0_12, %c0_13] : memref<32x128xf32, #tpu.memory_space<vmem>>, vector<32x128xf32>
    %c0_14 = arith.constant 0 : index
    %c0_15 = arith.constant 0 : index
    %16 = vector.load %arg7[%c0_14, %c0_15] : memref<1x128xf32, #tpu.memory_space<vmem>>, vector<1x128xf32>
    %cst_16 = arith.constant dense<0.000000e+00> : vector<128x128xf32>
    %17 = tpu.matmul %14, %15, %cst_16 {dimension_numbers = #tpu.dot_dimension_numbers<[1], [0], [0], [1], [0, 0, 1, 1], [], []>} : vector<128x32xf32>, vector<32x128xf32>, vector<128x128xf32> -> vector<128x128xf32>
    %18 = vector.broadcast %16 : vector<1x128xf32> to vector<128x128xf32>
    %19 = arith.addf %17, %18 : vector<128x128xf32>
    %c0_17 = arith.constant 0 : index
    %c0_18 = arith.constant 0 : index
    %20 = vector.load %arg8[%c0_17, %c0_18] : memref<128x128xf32, #tpu.memory_space<vmem>>, vector<128x128xf32>
    tpu.vector_store %arg8[%c0_17, %c0_18], %19 {strides = array<i32>} : memref<128x128xf32, #tpu.memory_space<vmem>>, vector<128x128xf32>,
    return
  }
  func.func @transform_0(%arg0: i32) -> (i32, i32) {
    %c0_i32 = arith.constant 0 : i32
    %c0_i32_0 = arith.constant 0 : i32
    return %arg0, %c0_i32 : i32, i32
  }
  func.func @transform_1(%arg0: i32) -> (i32, i32) {
    %c0_i32 = arith.constant 0 : i32
    %c0_i32_0 = arith.constant 0 : i32
    %c0_i32_1 = arith.constant 0 : i32
    return %c0_i32, %c0_i32_0 : i32, i32
  }
  func.func @transform_2(%arg0: i32) -> (i32, i32) {
    %c0_i32 = arith.constant 0 : i32
    %c0_i32_0 = arith.constant 0 : i32
    %c0_i32_1 = arith.constant 0 : i32
    return %c0_i32, %c0_i32_0 : i32, i32
  }
  func.func @transform_3(%arg0: i32) -> (i32, i32) {
    %c0_i32 = arith.constant 0 : i32
    %c0_i32_0 = arith.constant 0 : i32
    %c0_i32_1 = arith.constant 0 : i32
    return %c0_i32, %c0_i32_0 : i32, i32
  }
  func.func @transform_4(%arg0: i32) -> (i32, i32) {
    %c0_i32 = arith.constant 0 : i32
    %c0_i32_0 = arith.constant 0 : i32
    %c0_i32_1 = arith.constant 0 : i32
    return %c0_i32, %c0_i32_0 : i32, i32
  }
  func.func @transform_5(%arg0: i32) -> (i32, i32) {
    %c0_i32 = arith.constant 0 : i32
    %c0_i32_0 = arith.constant 0 : i32
    %c0_i32_1 = arith.constant 0 : i32
    return %c0_i32, %c0_i32_0 : i32, i32
  }
  func.func @transform_6(%arg0: i32) -> (i32, i32) {
    %c0_i32 = arith.constant 0 : i32
    %c0_i32_0 = arith.constant 0 : i32
    %c0_i32_1 = arith.constant 0 : i32
    return %c0_i32, %c0_i32_0 : i32, i32
  }
  func.func @transform_7(%arg0: i32) -> (i32, i32) {
    %c0_i32 = arith.constant 0 : i32
    %c0_i32_0 = arith.constant 0 : i32
    return %arg0, %c0_i32 : i32, i32
  }
}

</mosaic_0001>

<llo_original>
// kernel: tpu_custom_call.1
$region0: #{tpu_custom_call.1}
  #allocation0 [shape = 'u32[]', space=smem, size = 0x4, offset = 0x4, fixed_abs, tag = 'smem constant byte address 0x4 - core index']
  #allocation1 [shape = 'u32[72,128]{1,0:T(1,128)}', space=vmem, size = 0x9000, scoped, tag = 'internal scratch']
  %s0 = inlined_call_operand.vmem [shape: f32[256,32], index: 0, kind: input, shape index: {}]
  %s1 = inlined_call_operand.vmem [shape: f32[32,64], index: 1, kind: input, shape index: {}]
  %s2 = inlined_call_operand.vmem [shape: f32[1,64], index: 2, kind: input, shape index: {}]
  %s3 = inlined_call_operand.vmem [shape: f32[64,32], index: 3, kind: input, shape index: {}]
  %s4 = inlined_call_operand.vmem [shape: f32[1,32], index: 4, kind: input, shape index: {}]
  %s5 = inlined_call_operand.vmem [shape: f32[32,128], index: 5, kind: input, shape index: {}]
  %s6 = inlined_call_operand.vmem [shape: f32[1,128], index: 6, kind: input, shape index: {}]
  %s7 = inlined_call_operand.hbm [shape: f32[256,128], index: 7, kind: output, shape index: {}]
  %s8 = sld [smem:[#allocation0]]
  $region61: #{tpu_custom_call.1} parent=0
    _
  %s10 = ssub.s32 1, %s8
  %s11 = scalar_select 0, %s10, %s8
  $region1: #{tpu_custom_call.1} parent=0
    #allocation2 [shape = 'u8[131072]{0}', space=vmem, size = 0x20000, scoped, tag = 'output window, operand 0']
    #allocation3 [shape = 's32[2]{0}', space=sflag, size = 0x8, scoped, tag = 'scoped memory for tpu_custom_call.1']
    %12 = vsyncpa [#allocation3], 0
    %s13 = scalar_lea.sflag [#allocation3], 1
    %14 = vsyncpa %s13, 0
    loop: start=0, step=1, limit=4
    $region2: #{tpu_custom_call.1} parent=1 // loop_pre_header
      _
    $region3: #{tpu_custom_call.1} parent=1 // loop_header
      %s16 = sphi 0, %s20
      %p17 = scmp.ge.s32.totalorder %s16, 4
      %s26 = sphi 0, %s28
      %s29 = sphi 0, %s26
      %s30 = sphi 0, %s29
      %s46 = sphi 0, %s30
      %s50 = sphi 0, %s50
      %s52 = sphi 0, %s50
      %s53 = sphi 0, %s52
      %s67 = sphi 0, %s53
      %s71 = sphi 0, %s71
      %s73 = sphi 0, %s71
      %s74 = sphi 0, %s73
      %s88 = sphi 0, %s74
      %s92 = sphi 0, %s92
      %s94 = sphi 0, %s92
      %s95 = sphi 0, %s94
      %s109 = sphi 0, %s95
      %s113 = sphi 0, %s113
      %s115 = sphi 0, %s113
      %s116 = sphi 0, %s115
      %s130 = sphi 0, %s116
      %s134 = sphi 0, %s134
      %s136 = sphi 0, %s134
      %s137 = sphi 0, %s136
      %s151 = sphi 0, %s137
      %s155 = sphi 0, %s155
      %s157 = sphi 0, %s155
      %s158 = sphi 0, %s157
      %s172 = sphi 0, %s158
      %s178 = sphi 0, %s180
      %s181 = sphi 0, %s178
      %s182 = sphi 0, %s181
      %s198 = sphi 0, %s182
    $region4: #{tpu_custom_call.1} parent=1 // loop_header_branch
      %19 = sbr.rel (%p17) target = $region8
    $region5: #{tpu_custom_call.1} parent=1 // loop_body
      %s21 = ssub.s32 %s16, 1
      %s22 = ssub.s32 %s16, 2
      %s23 = sadd.s32 %s16, 1
      %s24 = ssub.s32 %s16, %s23
      %p25 = scmp.eq.s32.totalorder %s24, 0
      %s27 = sadd.s32 %s26, 1
      %s28 = scalar_select %p25, %s26, %s27
      %p31 = pneg %p25
      %p32 = scmp.eq.s32.totalorder %s16, 1
      %p33 = por %p31, %p32
      %p34 = scmp.ne.s32.totalorder %s26, %s29
      %p35 = scmp.eq.s32.totalorder %s16, 0
      %p36 = por %p34, %p35
      %p37 = scmp.ne.s32.totalorder %s26, %s29
      %p38 = scmp.eq.s32.totalorder %s21, 1
      %p39 = por %p37, %p38
      %p40 = scmp.ne.s32.totalorder %s29, %s30
      %p41 = scmp.eq.s32.totalorder %s21, 0
      %p42 = por %p40, %p41
      %p43 = scmp.ne.s32.totalorder %s29, %s30
      %p44 = scmp.eq.s32.totalorder %s22, 1
      %p45 = por %p43, %p44
      %p47 = scmp.ne.s32.totalorder %s30, %s46
      %p48 = scmp.eq.s32.totalorder %s22, 0
      %p49 = por %p47, %p48
      %s51 = sadd.s32 %s50, 1
      %p54 = scmp.eq.s32.totalorder %s16, 1
      %p55 = scmp.ne.s32.totalorder %s50, %s52
      %p56 = scmp.eq.s32.totalorder %s16, 0
      %p57 = por %p55, %p56
      %p58 = scmp.ne.s32.totalorder %s50, %s52
      %p59 = scmp.eq.s32.totalorder %s21, 1
      %p60 = por %p58, %p59
      %p61 = scmp.ne.s32.totalorder %s52, %s53
      %p62 = scmp.eq.s32.totalorder %s21, 0
      %p63 = por %p61, %p62
      %p64 = scmp.ne.s32.totalorder %s52, %s53
      %p65 = scmp.eq.s32.totalorder %s22, 1
      %p66 = por %p64, %p65
      %p68 = scmp.ne.s32.totalorder %s53, %s67
      %p69 = scmp.eq.s32.totalorder %s22, 0
      %p70 = por %p68, %p69
      %s72 = sadd.s32 %s71, 1
      %p75 = scmp.eq.s32.totalorder %s16, 1
      %p76 = scmp.ne.s32.totalorder %s71, %s73
      %p77 = scmp.eq.s32.totalorder %s16, 0
      %p78 = por %p76, %p77
      %p79 = scmp.ne.s32.totalorder %s71, %s73
      %p80 = scmp.eq.s32.totalorder %s21, 1
      %p81 = por %p79, %p80
      %p82 = scmp.ne.s32.totalorder %s73, %s74
      %p83 = scmp.eq.s32.totalorder %s21, 0
      %p84 = por %p82, %p83
      %p85 = scmp.ne.s32.totalorder %s73, %s74
      %p86 = scmp.eq.s32.totalorder %s22, 1
      %p87 = por %p85, %p86
      %p89 = scmp.ne.s32.totalorder %s74, %s88
      %p90 = scmp.eq.s32.totalorder %s22, 0
      %p91 = por %p89, %p90
      %s93 = sadd.s32 %s92, 1
      %p96 = scmp.eq.s32.totalorder %s16, 1
      %p97 = scmp.ne.s32.totalorder %s92, %s94
      %p98 = scmp.eq.s32.totalorder %s16, 0
      %p99 = por %p97, %p98
      %p100 = scmp.ne.s32.totalorder %s92, %s94
      %p101 = scmp.eq.s32.totalorder %s21, 1
      %p102 = por %p100, %p101
      %p103 = scmp.ne.s32.totalorder %s94, %s95
      %p104 = scmp.eq.s32.totalorder %s21, 0
      %p105 = por %p103, %p104
      %p106 = scmp.ne.s32.totalorder %s94, %s95
      %p107 = scmp.eq.s32.totalorder %s22, 1
      %p108 = por %p106, %p107
      %p110 = scmp.ne.s32.totalorder %s95, %s109
      %p111 = scmp.eq.s32.totalorder %s22, 0
      %p112 = por %p110, %p111
      %s114 = sadd.s32 %s113, 1
      %p117 = scmp.eq.s32.totalorder %s16, 1
      %p118 = scmp.ne.s32.totalorder %s113, %s115
      %p119 = scmp.eq.s32.totalorder %s16, 0
      %p120 = por %p118, %p119
      %p121 = scmp.ne.s32.totalorder %s113, %s115
      %p122 = scmp.eq.s32.totalorder %s21, 1
      %p123 = por %p121, %p122
      %p124 = scmp.ne.s32.totalorder %s115, %s116
      %p125 = scmp.eq.s32.totalorder %s21, 0
      %p126 = por %p124, %p125
      %p127 = scmp.ne.s32.totalorder %s115, %s116
      %p128 = scmp.eq.s32.totalorder %s22, 1
      %p129 = por %p127, %p128
      %p131 = scmp.ne.s32.totalorder %s116, %s130
      %p132 = scmp.eq.s32.totalorder %s22, 0
      %p133 = por %p131, %p132
      %s135 = sadd.s32 %s134, 1
      %p138 = scmp.eq.s32.totalorder %s16, 1
      %p139 = scmp.ne.s32.totalorder %s134, %s136
      %p140 = scmp.eq.s32.totalorder %s16, 0
      %p141 = por %p139, %p140
      %p142 = scmp.ne.s32.totalorder %s134, %s136
      %p143 = scmp.eq.s32.totalorder %s21, 1
      %p144 = por %p142, %p143
      %p145 = scmp.ne.s32.totalorder %s136, %s137
      %p146 = scmp.eq.s32.totalorder %s21, 0
      %p147 = por %p145, %p146
      %p148 = scmp.ne.s32.totalorder %s136, %s137
      %p149 = scmp.eq.s32.totalorder %s22, 1
      %p150 = por %p148, %p149
      %p152 = scmp.ne.s32.totalorder %s137, %s151
      %p153 = scmp.eq.s32.totalorder %s22, 0
      %p154 = por %p152, %p153
      %s156 = sadd.s32 %s155, 1
      %p159 = scmp.eq.s32.totalorder %s16, 1
      %p160 = scmp.ne.s32.totalorder %s155, %s157
      %p161 = scmp.eq.s32.totalorder %s16, 0
      %p162 = por %p160, %p161
      %p163 = scmp.ne.s32.totalorder %s155, %s157
      %p164 = scmp.eq.s32.totalorder %s21, 1
      %p165 = por %p163, %p164
      %p166 = scmp.ne.s32.totalorder %s157, %s158
      %p167 = scmp.eq.s32.totalorder %s21, 0
      %p168 = por %p166, %p167
      %p169 = scmp.ne.s32.totalorder %s157, %s158
      %p170 = scmp.eq.s32.totalorder %s22, 1
      %p171 = por %p169, %p170
      %p173 = scmp.ne.s32.totalorder %s158, %s172
      %p174 = scmp.eq.s32.totalorder %s22, 0
      %p175 = por %p173, %p174
      %s176 = ssub.s32 %s16, %s23
      %p177 = scmp.eq.s32.totalorder %s176, 0
      %s179 = sadd.s32 %s178, 1
      %s180 = scalar_select %p177, %s178, %s179
      %p183 = pneg %p177
      %p184 = scmp.eq.s32.totalorder %s16, 1
      %p185 = por %p183, %p184
      %p186 = scmp.ne.s32.totalorder %s178, %s181
      %p187 = scmp.eq.s32.totalorder %s16, 0
      %p188 = por %p186, %p187
      %p189 = scmp.ne.s32.totalorder %s178, %s181
      %p190 = scmp.eq.s32.totalorder %s21, 1
      %p191 = por %p189, %p190
      %p192 = scmp.ne.s32.totalorder %s181, %s182
      %p193 = scmp.eq.s32.totalorder %s21, 0
      %p194 = por %p192, %p193
      %p195 = scmp.ne.s32.totalorder %s181, %s182
      %p196 = scmp.eq.s32.totalorder %s22, 1
      %p197 = por %p195, %p196
      %p199 = scmp.ne.s32.totalorder %s182, %s198
      %p200 = scmp.eq.s32.totalorder %s22, 0
      %p201 = por %p199, %p200
      %p202 = scmp.le.s32.totalorder 1, %s16
      %p203 = scmp.lt.s32.totalorder %s16, 3
      %p204 = pnand %p202, %p203
      %p205 = pneg %p204
      // Predicated region
      $region9: #{tpu_custom_call.1} parent=5 // pred_check
        _
      $region10: #{tpu_custom_call.1} parent=5 // pred_check_branch
        %207 = sbr.rel (%p204) target = $region12
      $region11: #{tpu_custom_call.1} parent=5 // pred_region
        %s208 = ssub.s32 %s16, 1
        // Predicated region
        $region13: #{tpu_custom_call.1} parent=11 // pred_check
          %p209 = pneg %p63
        $region14: #{tpu_custom_call.1} parent=11 // pred_check_branch
          %211 = sbr.rel (%p209) target = $region16
        $region15: #{tpu_custom_call.1} parent=11 // pred_region
          _
        $region16: #{tpu_custom_call.1} parent=11 // pred_fallthru
          _
        // Predicated region
        $region17: #{tpu_custom_call.1} parent=11 // pred_check
          %p212 = pneg %p84
        $region18: #{tpu_custom_call.1} parent=11 // pred_check_branch
          %214 = sbr.rel (%p212) target = $region20
        $region19: #{tpu_custom_call.1} parent=11 // pred_region
          _
        $region20: #{tpu_custom_call.1} parent=11 // pred_fallthru
          _
        // Predicated region
        $region21: #{tpu_custom_call.1} parent=11 // pred_check
          %p215 = pneg %p105
        $region22: #{tpu_custom_call.1} parent=11 // pred_check_branch
          %217 = sbr.rel (%p215) target = $region24
        $region23: #{tpu_custom_call.1} parent=11 // pred_region
          _
        $region24: #{tpu_custom_call.1} parent=11 // pred_fallthru
          _
        // Predicated region
        $region25: #{tpu_custom_call.1} parent=11 // pred_check
          %p218 = pneg %p126
        $region26: #{tpu_custom_call.1} parent=11 // pred_check_branch
          %220 = sbr.rel (%p218) target = $region28
        $region27: #{tpu_custom_call.1} parent=11 // pred_region
          _
        $region28: #{tpu_custom_call.1} parent=11 // pred_fallthru
          _
        // Predicated region
        $region29: #{tpu_custom_call.1} parent=11 // pred_check
          %p221 = pneg %p147
        $region30: #{tpu_custom_call.1} parent=11 // pred_check_branch
          %223 = sbr.rel (%p221) target = $region32
        $region31: #{tpu_custom_call.1} parent=11 // pred_region
          _
        $region32: #{tpu_custom_call.1} parent=11 // pred_fallthru
          _
        // Predicated region
        $region33: #{tpu_custom_call.1} parent=11 // pred_check
          %p224 = pneg %p168
        $region34: #{tpu_custom_call.1} parent=11 // pred_check_branch
          %226 = sbr.rel (%p224) target = $region36
        $region35: #{tpu_custom_call.1} parent=11 // pred_region
          _
        $region36: #{tpu_custom_call.1} parent=11 // pred_fallthru
          _
      $region12: #{tpu_custom_call.1} parent=5 // pred_fallthru
        _
      %p227 = scmp.lt.s32.totalorder %s16, 2
      // Predicated region
      $region37: #{tpu_custom_call.1} parent=5 // pred_check
        %p228 = pneg %p227
      $region38: #{tpu_custom_call.1} parent=5 // pred_check_branch
        %230 = sbr.rel (%p228) target = $region40
      $region39: #{tpu_custom_call.1} parent=5 // pred_region
        // Predicated region
        $region41: #{tpu_custom_call.1} parent=39 // pred_check
          %p231 = pneg %p36
        $region42: #{tpu_custom_call.1} parent=39 // pred_check_branch
          %233 = sbr.rel (%p231) target = $region44
        $region43: #{tpu_custom_call.1} parent=39 // pred_region
          %s234 = smul.u32 16, %s16
          %p235 = scmp.lt.s32.totalorder %s234, 31
          %s236 = scalar_select %p235, %s234, 31
          %s237 = smul.addr %s236, 8
          %s238 = scalar_lea.vmem %s0, %s237
          %s239 = smul.u32 16, %s16
        $region44: #{tpu_custom_call.1} parent=39 // pred_fallthru
          _
      $region40: #{tpu_custom_call.1} parent=5 // pred_fallthru
        _
      %p240 = scmp.le.s32.totalorder 1, %s16
      %p241 = scmp.lt.s32.totalorder %s16, 3
      %p242 = pnand %p240, %p241
      %p243 = pneg %p242
      // Predicated region
      $region45: #{tpu_custom_call.1} parent=5 // pred_check
        _
      $region46: #{tpu_custom_call.1} parent=5 // pred_check_branch
        %245 = sbr.rel (%p242) target = $region48
      $region47: #{tpu_custom_call.1} parent=5 // pred_region
        %s246 = ssub.s32 %s16, 1
        %s247 = smul.u32 16, %s21
        %p248 = scmp.lt.s32.totalorder %s247, 31
        %s249 = scalar_select %p248, %s247, 31
        %s250 = smul.addr %s249, 8
        %s251 = scalar_lea.vmem %s0, %s250
        %p252 = pneg %p42
        %p253 = pneg %p39
        %p254 = pneg %p63
        %p255 = pneg %p60
        %p256 = pneg %p84
        %p257 = pneg %p81
        %p258 = pneg %p105
        %p259 = pneg %p102
        %p260 = pneg %p126
        %p261 = pneg %p123
        %p262 = pneg %p147
        %p263 = pneg %p144
        %p264 = pneg %p168
        %p265 = pneg %p165
        %p266 = pneg %p194
        %p267 = pneg %p191
        %s268 = sand.u32 %s181, 1
        %s269 = scalar_lea.sflag [#allocation3], %s268
        %s270 = sand.u32 %s181, 1
        %s271 = smul.addr %s270, 128
        %s272 = scalar_lea.vmem [#allocation2], %s271
        %s273 = smul.u32 16, %s21
        %p274 = scmp.lt.s32.totalorder %s273, 31
        %s275 = scalar_select %p274, %s273, 31
        %s276 = smul.addr %s275, 8
        %s277 = scalar_lea.vmem %s0, %s276
        %s278 = smul.u32 16, %s21
        %s279 = smul.u32 16, %s21
        %v280 = vld [vmem:[%s277] sm:$0xff]
        %v281 = vld [vmem:[%s277 + $0x8] sm:$0xff]
        %v282 = vld [vmem:[%s277 + $0x10] sm:$0xff]
        %v283 = vld [vmem:[%s277 + $0x18] sm:$0xff]
        %v284 = vld [vmem:[%s277 + $0x20] sm:$0xff]
        %v285 = vld [vmem:[%s277 + $0x28] sm:$0xff]
        %v286 = vld [vmem:[%s277 + $0x30] sm:$0xff]
        %v287 = vld [vmem:[%s277 + $0x38] sm:$0xff]
        %v288 = vld [vmem:[%s277 + $0x40] sm:$0xff]
        %v289 = vld [vmem:[%s277 + $0x48] sm:$0xff]
        %v290 = vld [vmem:[%s277 + $0x50] sm:$0xff]
        %v291 = vld [vmem:[%s277 + $0x58] sm:$0xff]
        %v292 = vld [vmem:[%s277 + $0x60] sm:$0xff]
        %v293 = vld [vmem:[%s277 + $0x68] sm:$0xff]
        %v294 = vld [vmem:[%s277 + $0x70] sm:$0xff]
        %v295 = vld [vmem:[%s277 + $0x78] sm:$0xff]
        %v296 = vld [vmem:[%s1] sm:$0xff]
        %v297 = vld [vmem:[%s1 + $0x8] sm:$0xff]
        %v298 = vld [vmem:[%s1 + $0x10] sm:$0xff]
        %v299 = vld [vmem:[%s1 + $0x18] sm:$0xff]
        %v300 = vld [vmem:[%s2] sm:$0x1]
        %v302 = vperm.slane %v300, 0
        %vm304 = vcmask 261120
        %v306 = vsel %vm304, %v280, 0
        %v309 = vsel %vm304, %v281, 0
        %v312 = vsel %vm304, %v282, 0
        %v315 = vsel %vm304, %v283, 0
        %v318 = vsel %vm304, %v284, 0
        %v321 = vsel %vm304, %v285, 0
        %v324 = vsel %vm304, %v286, 0
        %v327 = vsel %vm304, %v287, 0
        %v330 = vsel %vm304, %v288, 0
        %v333 = vsel %vm304, %v289, 0
        %v336 = vsel %vm304, %v290, 0
        %v339 = vsel %vm304, %v291, 0
        %v342 = vsel %vm304, %v292, 0
        %v345 = vsel %vm304, %v293, 0
        %v348 = vsel %vm304, %v294, 0
        %v351 = vsel %vm304, %v295, 0
        %353 = vmatpush.msra.mxu0 0.0
        %354 = vmatpush.msra.mxu0 0.0
        %355 = vmatpush.msra.mxu0 0.0
        %356 = vmatpush.msra.mxu0 0.0
        %357 = vmatpush.msra.mxu0 0.0
        %358 = vmatpush.msra.mxu0 0.0
        %359 = vmatpush.msra.mxu0 0.0
        %360 = vmatpush.msra.mxu0 0.0
        %361 = vmatpush.msra.mxu0 0.0
        %362 = vmatpush.msra.mxu0 0.0
        %363 = vmatpush.msra.mxu0 0.0
        %364 = vmatpush.msra.mxu0 0.0
        %365 = vmatpush.msra.mxu0 %v299
        %366 = vmatpush.msra.mxu0 %v298
        %367 = vmatpush.msra.mxu0 %v297
        %368 = vmatpush.msra.mxu0 %v296
        %369 = vmatmul.f32.gmra.mxu0 %v306
        %v370 = vpop.f32.mrf.mxu0
        %v371 = vadd.f32 %v302, %v370
        %372 = vmatmul.f32.gmra.mxu0 %v309
        %v373 = vpop.f32.mrf.mxu0
        %v374 = vadd.f32 %v302, %v373
        %375 = vmatmul.f32.gmra.mxu0 %v312
        %v376 = vpop.f32.mrf.mxu0
        %v377 = vadd.f32 %v302, %v376
        %378 = vmatmul.f32.gmra.mxu0 %v315
        %v379 = vpop.f32.mrf.mxu0
        %v380 = vadd.f32 %v302, %v379
        %381 = vmatmul.f32.gmra.mxu0 %v318
        %v382 = vpop.f32.mrf.mxu0
        %v383 = vadd.f32 %v302, %v382
        %384 = vmatmul.f32.gmra.mxu0 %v321
        %v385 = vpop.f32.mrf.mxu0
        %v386 = vadd.f32 %v302, %v385
        %387 = vmatmul.f32.gmra.mxu0 %v324
        %v388 = vpop.f32.mrf.mxu0
        %v389 = vadd.f32 %v302, %v388
        %390 = vmatmul.f32.gmra.mxu0 %v327
        %v391 = vpop.f32.mrf.mxu0
        %v392 = vadd.f32 %v302, %v391
        %393 = vmatmul.f32.gmra.mxu0 %v330
        %v394 = vpop.f32.mrf.mxu0
        %v395 = vadd.f32 %v302, %v394
        %396 = vmatmul.f32.gmra.mxu0 %v333
        %v397 = vpop.f32.mrf.mxu0
        %v398 = vadd.f32 %v302, %v397
        %399 = vmatmul.f32.gmra.mxu0 %v336
        %v400 = vpop.f32.mrf.mxu0
        %v401 = vadd.f32 %v302, %v400
        %402 = vmatmul.f32.gmra.mxu0 %v339
        %v403 = vpop.f32.mrf.mxu0
        %v404 = vadd.f32 %v302, %v403
        %405 = vmatmul.f32.gmra.mxu0 %v342
        %v406 = vpop.f32.mrf.mxu0
        %v407 = vadd.f32 %v302, %v406
        %408 = vmatmul.f32.gmra.mxu0 %v345
        %v409 = vpop.f32.mrf.mxu0
        %v410 = vadd.f32 %v302, %v409
        %411 = vmatmul.f32.gmra.mxu0 %v348
        %v412 = vpop.f32.mrf.mxu0
        %v413 = vadd.f32 %v302, %v412
        %414 = vmatmul.f32.gmra.mxu0 %v351
        %v415 = vpop.f32.mrf.mxu0
        %v416 = vadd.f32 %v302, %v415
        %417 = vdwg.mxu0
        %v418 = vmax.f32 %v371, 0.0
        %v419 = vmax.f32 %v374, 0.0
        %v420 = vmax.f32 %v377, 0.0
        %v421 = vmax.f32 %v380, 0.0
        %v422 = vmax.f32 %v383, 0.0
        %v423 = vmax.f32 %v386, 0.0
        %v424 = vmax.f32 %v389, 0.0
        %v425 = vmax.f32 %v392, 0.0
        %v426 = vmax.f32 %v395, 0.0
        %v427 = vmax.f32 %v398, 0.0
        %v428 = vmax.f32 %v401, 0.0
        %v429 = vmax.f32 %v404, 0.0
        %v430 = vmax.f32 %v407, 0.0
        %v431 = vmax.f32 %v410, 0.0
        %v432 = vmax.f32 %v413, 0.0
        %v433 = vmax.f32 %v416, 0.0
        %v434 = vld [vmem:[%s3] sm:$0xff]
        %v435 = vld [vmem:[%s3 + $0x8] sm:$0xff]
        %v436 = vld [vmem:[%s3 + $0x10] sm:$0xff]
        %v437 = vld [vmem:[%s3 + $0x18] sm:$0xff]
        %v438 = vld [vmem:[%s3 + $0x20] sm:$0xff]
        %v439 = vld [vmem:[%s3 + $0x28] sm:$0xff]
        %v440 = vld [vmem:[%s3 + $0x30] sm:$0xff]
        %v441 = vld [vmem:[%s3 + $0x38] sm:$0xff]
        %v442 = vld [vmem:[%s4] sm:$0x1]
        %v444 = vperm.slane %v442, 0
        %vm446 = vcmask 523264
        %v448 = vsel %vm446, %v418, 0
        %v451 = vsel %vm446, %v419, 0
        %v454 = vsel %vm446, %v420, 0
        %v457 = vsel %vm446, %v421, 0
        %v460 = vsel %vm446, %v422, 0
        %v463 = vsel %vm446, %v423, 0
        %v466 = vsel %vm446, %v424, 0
        %v469 = vsel %vm446, %v425, 0
        %v472 = vsel %vm446, %v426, 0
        %v475 = vsel %vm446, %v427, 0
        %v478 = vsel %vm446, %v428, 0
        %v481 = vsel %vm446, %v429, 0
        %v484 = vsel %vm446, %v430, 0
        %v487 = vsel %vm446, %v431, 0
        %v490 = vsel %vm446, %v432, 0
        %v493 = vsel %vm446, %v433, 0
        %495 = vmatpush.msra.mxu0 0.0
        %496 = vmatpush.msra.mxu0 0.0
        %497 = vmatpush.msra.mxu0 0.0
        %498 = vmatpush.msra.mxu0 0.0
        %499 = vmatpush.msra.mxu0 0.0
        %500 = vmatpush.msra.mxu0 0.0
        %501 = vmatpush.msra.mxu0 0.0
        %502 = vmatpush.msra.mxu0 0.0
        %503 = vmatpush.msra.mxu0 %v441
        %504 = vmatpush.msra.mxu0 %v440
        %505 = vmatpush.msra.mxu0 %v439
        %506 = vmatpush.msra.mxu0 %v438
        %507 = vmatpush.msra.mxu0 %v437
        %508 = vmatpush.msra.mxu0 %v436
        %509 = vmatpush.msra.mxu0 %v435
        %510 = vmatpush.msra.mxu0 %v434
        %511 = vmatmul.f32.gmra.mxu0 %v448
        %v512 = vpop.f32.mrf.mxu0
        %v513 = vadd.f32 %v444, %v512
        %514 = vmatmul.f32.gmra.mxu0 %v451
        %v515 = vpop.f32.mrf.mxu0
        %v516 = vadd.f32 %v444, %v515
        %517 = vmatmul.f32.gmra.mxu0 %v454
        %v518 = vpop.f32.mrf.mxu0
        %v519 = vadd.f32 %v444, %v518
        %520 = vmatmul.f32.gmra.mxu0 %v457
        %v521 = vpop.f32.mrf.mxu0
        %v522 = vadd.f32 %v444, %v521
        %523 = vmatmul.f32.gmra.mxu0 %v460
        %v524 = vpop.f32.mrf.mxu0
        %v525 = vadd.f32 %v444, %v524
        %526 = vmatmul.f32.gmra.mxu0 %v463
        %v527 = vpop.f32.mrf.mxu0
        %v528 = vadd.f32 %v444, %v527
        %529 = vmatmul.f32.gmra.mxu0 %v466
        %v530 = vpop.f32.mrf.mxu0
        %v531 = vadd.f32 %v444, %v530
        %532 = vmatmul.f32.gmra.mxu0 %v469
        %v533 = vpop.f32.mrf.mxu0
        %v534 = vadd.f32 %v444, %v533
        %535 = vmatmul.f32.gmra.mxu0 %v472
        %v536 = vpop.f32.mrf.mxu0
        %v537 = vadd.f32 %v444, %v536
        %538 = vmatmul.f32.gmra.mxu0 %v475
        %v539 = vpop.f32.mrf.mxu0
        %v540 = vadd.f32 %v444, %v539
        %541 = vmatmul.f32.gmra.mxu0 %v478
        %v542 = vpop.f32.mrf.mxu0
        %v543 = vadd.f32 %v444, %v542
        %544 = vmatmul.f32.gmra.mxu0 %v481
        %v545 = vpop.f32.mrf.mxu0
        %v546 = vadd.f32 %v444, %v545
        %547 = vmatmul.f32.gmra.mxu0 %v484
        %v548 = vpop.f32.mrf.mxu0
        %v549 = vadd.f32 %v444, %v548
        %550 = vmatmul.f32.gmra.mxu0 %v487
        %v551 = vpop.f32.mrf.mxu0
        %v552 = vadd.f32 %v444, %v551
        %553 = vmatmul.f32.gmra.mxu0 %v490
        %v554 = vpop.f32.mrf.mxu0
        %v555 = vadd.f32 %v444, %v554
        %556 = vmatmul.f32.gmra.mxu0 %v493
        %v557 = vpop.f32.mrf.mxu0
        %v558 = vadd.f32 %v444, %v557
        %559 = vdwg.mxu0
        %v560 = vmax.f32 %v513, 0.0
        %v561 = vmax.f32 %v516, 0.0
        %v562 = vmax.f32 %v519, 0.0
        %v563 = vmax.f32 %v522, 0.0
        %v564 = vmax.f32 %v525, 0.0
        %v565 = vmax.f32 %v528, 0.0
        %v566 = vmax.f32 %v531, 0.0
        %v567 = vmax.f32 %v534, 0.0
        %v568 = vmax.f32 %v537, 0.0
        %v569 = vmax.f32 %v540, 0.0
        %v570 = vmax.f32 %v543, 0.0
        %v571 = vmax.f32 %v546, 0.0
        %v572 = vmax.f32 %v549, 0.0
        %v573 = vmax.f32 %v552, 0.0
        %v574 = vmax.f32 %v555, 0.0
        %v575 = vmax.f32 %v558, 0.0
        %v576 = vld [vmem:[%s5] sm:$0xff]
        %v577 = vld [vmem:[%s5 + $0x8] sm:$0xff]
        %v578 = vld [vmem:[%s5 + $0x10] sm:$0xff]
        %v579 = vld [vmem:[%s5 + $0x18] sm:$0xff]
        %v580 = vld [vmem:[%s6] sm:$0x1]
        %v582 = vperm.slane %v580, 0
        %v585 = vsel %vm304, %v560, 0
        %v588 = vsel %vm304, %v561, 0
        %v591 = vsel %vm304, %v562, 0
        %v594 = vsel %vm304, %v563, 0
        %v597 = vsel %vm304, %v564, 0
        %v600 = vsel %vm304, %v565, 0
        %v603 = vsel %vm304, %v566, 0
        %v606 = vsel %vm304, %v567, 0
        %v609 = vsel %vm304, %v568, 0
        %v612 = vsel %vm304, %v569, 0
        %v615 = vsel %vm304, %v570, 0
        %v618 = vsel %vm304, %v571, 0
        %v621 = vsel %vm304, %v572, 0
        %v624 = vsel %vm304, %v573, 0
        %v627 = vsel %vm304, %v574, 0
        %v630 = vsel %vm304, %v575, 0
        %632 = vmatpush.msra.mxu0 0.0
        %633 = vmatpush.msra.mxu0 0.0
        %634 = vmatpush.msra.mxu0 0.0
        %635 = vmatpush.msra.mxu0 0.0
        %636 = vmatpush.msra.mxu0 0.0
        %637 = vmatpush.msra.mxu0 0.0
        %638 = vmatpush.msra.mxu0 0.0
        %639 = vmatpush.msra.mxu0 0.0
        %640 = vmatpush.msra.mxu0 0.0
        %641 = vmatpush.msra.mxu0 0.0
        %642 = vmatpush.msra.mxu0 0.0
        %643 = vmatpush.msra.mxu0 0.0
        %644 = vmatpush.msra.mxu0 %v579
        %645 = vmatpush.msra.mxu0 %v578
        %646 = vmatpush.msra.mxu0 %v577
        %647 = vmatpush.msra.mxu0 %v576
        %648 = vmatmul.f32.gmra.mxu0 %v585
        %v649 = vpop.f32.mrf.mxu0
        %v650 = vadd.f32 %v582, %v649
        %651 = vmatmul.f32.gmra.mxu0 %v588
        %v652 = vpop.f32.mrf.mxu0
        %v653 = vadd.f32 %v582, %v652
        %654 = vmatmul.f32.gmra.mxu0 %v591
        %v655 = vpop.f32.mrf.mxu0
        %v656 = vadd.f32 %v582, %v655
        %657 = vmatmul.f32.gmra.mxu0 %v594
        %v658 = vpop.f32.mrf.mxu0
        %v659 = vadd.f32 %v582, %v658
        %660 = vmatmul.f32.gmra.mxu0 %v597
        %v661 = vpop.f32.mrf.mxu0
        %v662 = vadd.f32 %v582, %v661
        %663 = vmatmul.f32.gmra.mxu0 %v600
        %v664 = vpop.f32.mrf.mxu0
        %v665 = vadd.f32 %v582, %v664
        %666 = vmatmul.f32.gmra.mxu0 %v603
        %v667 = vpop.f32.mrf.mxu0
        %v668 = vadd.f32 %v582, %v667
        %669 = vmatmul.f32.gmra.mxu0 %v606
        %v670 = vpop.f32.mrf.mxu0
        %v671 = vadd.f32 %v582, %v670
        %672 = vmatmul.f32.gmra.mxu0 %v609
        %v673 = vpop.f32.mrf.mxu0
        %v674 = vadd.f32 %v582, %v673
        %675 = vmatmul.f32.gmra.mxu0 %v612
        %v676 = vpop.f32.mrf.mxu0
        %v677 = vadd.f32 %v582, %v676
        %678 = vmatmul.f32.gmra.mxu0 %v615
        %v679 = vpop.f32.mrf.mxu0
        %v680 = vadd.f32 %v582, %v679
        %681 = vmatmul.f32.gmra.mxu0 %v618
        %v682 = vpop.f32.mrf.mxu0
        %v683 = vadd.f32 %v582, %v682
        %684 = vmatmul.f32.gmra.mxu0 %v621
        %v685 = vpop.f32.mrf.mxu0
        %v686 = vadd.f32 %v582, %v685
        %687 = vmatmul.f32.gmra.mxu0 %v624
        %v688 = vpop.f32.mrf.mxu0
        %v689 = vadd.f32 %v582, %v688
        %690 = vmatmul.f32.gmra.mxu0 %v627
        %v691 = vpop.f32.mrf.mxu0
        %v692 = vadd.f32 %v582, %v691
        %693 = vmatmul.f32.gmra.mxu0 %v630
        %v694 = vpop.f32.mrf.mxu0
        %v695 = vadd.f32 %v582, %v694
        %696 = vdwg.mxu0
        %697 = vst [vmem:[%s272] sm:$0xff] %v650
        %698 = vst [vmem:[%s272 + $0x8] sm:$0xff] %v653
        %699 = vst [vmem:[%s272 + $0x10] sm:$0xff] %v656
        %700 = vst [vmem:[%s272 + $0x18] sm:$0xff] %v659
        %701 = vst [vmem:[%s272 + $0x20] sm:$0xff] %v662
        %702 = vst [vmem:[%s272 + $0x28] sm:$0xff] %v665
        %703 = vst [vmem:[%s272 + $0x30] sm:$0xff] %v668
        %704 = vst [vmem:[%s272 + $0x38] sm:$0xff] %v671
        %705 = vst [vmem:[%s272 + $0x40] sm:$0xff] %v674
        %706 = vst [vmem:[%s272 + $0x48] sm:$0xff] %v677
        %707 = vst [vmem:[%s272 + $0x50] sm:$0xff] %v680
        %708 = vst [vmem:[%s272 + $0x58] sm:$0xff] %v683
        %709 = vst [vmem:[%s272 + $0x60] sm:$0xff] %v686
        %710 = vst [vmem:[%s272 + $0x68] sm:$0xff] %v689
        %711 = vst [vmem:[%s272 + $0x70] sm:$0xff] %v692
        %712 = vst [vmem:[%s272 + $0x78] sm:$0xff] %v695
        %s713 = sand.u32 %s181, 1
        %s714 = scalar_lea.sflag [#allocation3], %s713
        %s715 = sand.u32 %s181, 1
        %s716 = smul.addr %s715, 128
        %s717 = scalar_lea.vmem [#allocation2], %s716
        // Predicated region
        $region49: #{tpu_custom_call.1} parent=47 // pred_check
          %p718 = pneg %p191
        $region50: #{tpu_custom_call.1} parent=47 // pred_check_branch
          %720 = sbr.rel (%p718) target = $region52
        $region51: #{tpu_custom_call.1} parent=47 // pred_region
          %s721 = smul.u32 16, %s21
          %723 = vsyncadd %s714, 0
          %s724 = smul.addr %s721, 8
          %s725 = scalar_lea.hbm %s7, %s724
          %s726 = sshll.u32 %s717, 4
          %s727 = int_to_ptr.vmem [resolvable:$true] %s726
          %s728 = sshll.u32 %s725, 4
          %s729 = int_to_ptr.hbm [resolvable:$true] %s728
          %734 = dma.vmem_to_hbm [thread:$0]  %s727, 2048, %s729, %s714, 128, 128, 8
        $region52: #{tpu_custom_call.1} parent=47 // pred_fallthru
          _
      $region48: #{tpu_custom_call.1} parent=5 // pred_fallthru
        _
      %p735 = scmp.le.s32.totalorder 2, %s16
      // Predicated region
      $region53: #{tpu_custom_call.1} parent=5 // pred_check
        %p736 = pneg %p735
      $region54: #{tpu_custom_call.1} parent=5 // pred_check_branch
        %738 = sbr.rel (%p736) target = $region56
      $region55: #{tpu_custom_call.1} parent=5 // pred_region
        %s739 = ssub.s32 %s16, 2
        // Predicated region
        $region57: #{tpu_custom_call.1} parent=55 // pred_check
          %p740 = pneg %p197
        $region58: #{tpu_custom_call.1} parent=55 // pred_check_branch
          %742 = sbr.rel (%p740) target = $region60
        $region59: #{tpu_custom_call.1} parent=55 // pred_region
          %s743 = sand.u32 %s182, 1
          %s744 = scalar_lea.sflag [#allocation3], %s743
          %s745 = sand.u32 %s182, 1
          %s746 = smul.addr %s745, 128
          %s747 = scalar_lea.vmem [#allocation2], %s746
          %749 = dma.done %s744, 2048
        $region60: #{tpu_custom_call.1} parent=55 // pred_fallthru
          _
      $region56: #{tpu_custom_call.1} parent=5 // pred_fallthru
        _
    $region6: #{tpu_custom_call.1} parent=1 // loop_footer
      %s20 = sadd.s32 1, %s16
    $region7: #{tpu_custom_call.1} parent=1 // loop_footer_branch
      %15 = sbr.rel target = $region3
    $region8: #{tpu_custom_call.1} parent=1 // loop_exit
      _
    %750 = vsyncpa [#allocation3], 1
    %s751 = scalar_lea.sflag [#allocation3], 1
    %752 = vsyncpa %s751, 1

</llo_original>
